<compile_context>
chip_gen: v7x
topology: tpu7x:2x2x1
jax: 0.10.0
libtpu: 0.0.40
codegen_flags: <defaults>
</compile_context>

<pallas_src>
import jax
import jax.numpy as jnp
from jax.experimental import pallas as pl
from jax.experimental.pallas import tpu as pltpu


def _encoder_kernel_vpu(x_ref, w_ref, b_ref, o_ref):
    # x_ref: (C, TN), w_ref: (H, C), b_ref: (H, 1), o_ref: (H, TN)
    # Small-C path: C broadcast FMAs on the VPU; bias seeds the accumulator
    # via implicit (H,1)->(H,TN) broadcast (no explicit per-tile broadcast op).
    x = x_ref[...]                        # (C, TN)
    w = w_ref[...]                        # (H, C)
    C = x.shape[0]
    acc = b_ref[...] + w[:, 0:1] * x[0:1, :]          # (H, TN)
    for c in range(1, C):                              # static unroll, C <= 8
        acc = acc + w[:, c:c + 1] * x[c:c + 1, :]
    o_ref[...] = acc.astype(o_ref.dtype)


def _encoder_kernel_mxu(x_ref, w_ref, b_ref, o_ref):
    # General-C path: one MXU matmul per lane tile, f32 accumulation.
    out = jnp.dot(w_ref[...], x_ref[...], preferred_element_type=jnp.float32)
    o_ref[...] = (out + b_ref[...]).astype(o_ref.dtype)


def encoder_forward(x, weight, bias, *, max_tile_n=1024):
    """Conv1d(kernel_size=1) forward.

    x:      (B, C_in, L) float32
    weight: (H, C_in)    float32   (squeezed from PyTorch (H, C_in, 1))
    bias:   (H,)         float32
    returns (B, H, L)    float32
    """
    B, C, L = x.shape
    H = weight.shape[0]
    N = B * L

    # Fold batch into the lane axis: (C, B*L). Layout plumbing, not compute.
    x2 = jnp.transpose(x, (1, 0, 2)).reshape(C, N)

    # Lane-dense tiling: tile size is a multiple of 128, capped at max_tile_n.
    n128 = pl.cdiv(N, 128) * 128
    tile_n = min(max_tile_n, n128)
    n_pad = pl.cdiv(N, tile_n) * tile_n
    if n_pad != N:
        x2 = jnp.pad(x2, ((0, 0), (0, n_pad - N)))
    grid_n = n_pad // tile_n

    bias2d = bias.reshape(H, 1)
    kernel = _encoder_kernel_vpu if C <= 8 else _encoder_kernel_mxu

    out2 = pl.pallas_call(
        kernel,
        out_shape=jax.ShapeDtypeStruct((H, n_pad), x.dtype),
        grid_spec=pltpu.PrefetchScalarGridSpec(
            num_scalar_prefetch=0,
            grid=(grid_n,),
            in_specs=[
                # x tile: (C, tile_n) -- lane-dense input DMA
                pl.BlockSpec((C, tile_n), lambda i: (0, i)),
                # weight / bias: constant index_map -> resident across tiles
                pl.BlockSpec((H, C), lambda i: (0, 0)),
                pl.BlockSpec((H, 1), lambda i: (0, 0)),
            ],
            # lane-dense output store (last dim = tile_n, multiple of 128)
            out_specs=pl.BlockSpec((H, tile_n), lambda i: (0, i)),
        ),
        compiler_params=pltpu.CompilerParams(
            dimension_semantics=("parallel",),
            # Blocks are small even double-buffered; 32 MiB fits every
            # generation's scoped-VMEM (v5e 16 MiB default raised, v7x 64 MiB
            # physical respected).
            vmem_limit_bytes=32 * 1024 * 1024,
        ),
    )(x2, weight, bias2d)

    # Strip lane padding and unfold batch: (H, N) -> (B, H, L).
    out = out2[:, :N].reshape(H, B, L)
    return jnp.transpose(out, (1, 0, 2))


def _reference(x, weight, bias):
    return jnp.einsum("hc,bcl->bhl", weight, x) + bias[None, :, None]


if __name__ == "__main__":
    key = jax.random.PRNGKey(0)

    # --- primary test: shapes consistent with the module's usage -----------
    # batch=2, input_size=4 (static/dynamic feature channels), L=16, hidden=32
    B, C_in, L, H = 2, 4, 16, 32
    k_x, k_w, k_b, k2 = jax.random.split(key, 4)

    x = jax.random.normal(k_x, (B, C_in, L), dtype=jnp.float32)
    # PyTorch Conv1d default init: U(-1/sqrt(fan_in), 1/sqrt(fan_in)), fan_in=C_in*1
    bound = 1.0 / jnp.sqrt(jnp.float32(C_in))
    weight = jax.random.uniform(k_w, (H, C_in), jnp.float32, -bound, bound)
    bias = jax.random.uniform(k_b, (H,), jnp.float32, -bound, bound)

    out = jax.block_until_ready(encoder_forward(x, weight, bias))
    assert out.shape == (B, H, L)
    assert jnp.allclose(out, _reference(x, weight, bias), atol=1e-5, rtol=1e-5)

    # --- secondary test: multi-tile grid + lane padding (VPU path) ---------
    kx2, kw2, kb2, k3 = jax.random.split(k2, 4)
    B2, C2, L2, H2 = 128, 4, 20, 32          # N = 2560 -> pad 3072, 3 tiles
    x2 = jax.random.normal(kx2, (B2, C2, L2), dtype=jnp.float32)
    w2 = jax.random.normal(kw2, (H2, C2), dtype=jnp.float32) * 0.1
    b2 = jax.random.normal(kb2, (H2,), dtype=jnp.float32) * 0.1
    o2 = jax.block_until_ready(encoder_forward(x2, w2, b2))
    assert jnp.allclose(o2, _reference(x2, w2, b2), atol=1e-5, rtol=1e-5)

    # --- tertiary test: larger channel count exercises the MXU path --------
    kx3, kw3, kb3 = jax.random.split(k3, 3)
    B3, C3, L3, H3 = 8, 16, 32, 64
    x3 = jax.random.normal(kx3, (B3, C3, L3), dtype=jnp.float32)
    w3 = jax.random.normal(kw3, (H3, C3), dtype=jnp.float32) * 0.1
    b3 = jax.random.normal(kb3, (H3,), dtype=jnp.float32) * 0.1
    o3 = jax.block_until_ready(encoder_forward(x3, w3, b3))
    assert jnp.allclose(o3, _reference(x3, w3, b3), atol=1e-4, rtol=1e-4)

    print("KERNEL_OK")
</pallas_src>

<mosaic_0001>
module attributes {stable_mosaic.version = 11 : i64} {
  func.func @_encoder_kernel_vpu(%arg0: i32, %arg1: memref<4x128xf32, #tpu.memory_space<vmem>>, %arg2: memref<32x4xf32, #tpu.memory_space<vmem>>, %arg3: memref<32x1xf32, #tpu.memory_space<vmem>>, %arg4: memref<32x128xf32, #tpu.memory_space<vmem>>) attributes {dimension_semantics = [#tpu.dimension_semantics<parallel>], iteration_bounds = array<i64: 1>, scalar_prefetch = 0 : i64, scratch_operands = 0 : i64, tpu.core_type = #tpu.core_type<tc>, window_params = [{transform_indices = @transform_0, window_bounds = array<i64: 4, 128>}, {pipeline_mode = #tpu.pipeline_mode<synchronous>, transform_indices = @transform_1, window_bounds = array<i64: 32, 4>}, {pipeline_mode = #tpu.pipeline_mode<synchronous>, transform_indices = @transform_2, window_bounds = array<i64: 32, 1>}, {transform_indices = @transform_3, window_bounds = array<i64: 32, 128>}]} {
    %c0 = arith.constant 0 : index
    %c0_0 = arith.constant 0 : index
    %0 = vector.load %arg1[%c0, %c0_0] : memref<4x128xf32, #tpu.memory_space<vmem>>, vector<4x128xf32>
    %c0_1 = arith.constant 0 : index
    %c0_2 = arith.constant 0 : index
    %1 = vector.load %arg2[%c0_1, %c0_2] : memref<32x4xf32, #tpu.memory_space<vmem>>, vector<32x4xf32>
    %c0_3 = arith.constant 0 : index
    %c0_4 = arith.constant 0 : index
    %2 = vector.load %arg3[%c0_3, %c0_4] : memref<32x1xf32, #tpu.memory_space<vmem>>, vector<32x1xf32>
    %3 = vector.extract_strided_slice %1 {offsets = [0, 0], sizes = [32, 1], strides = [1, 1]} : vector<32x4xf32> to vector<32x1xf32>
    %4 = vector.extract_strided_slice %0 {offsets = [0, 0], sizes = [1, 128], strides = [1, 1]} : vector<4x128xf32> to vector<1x128xf32>
    %5 = vector.broadcast %3 : vector<32x1xf32> to vector<32x128xf32>
    %6 = vector.broadcast %4 : vector<1x128xf32> to vector<32x128xf32>
    %7 = arith.mulf %5, %6 : vector<32x128xf32>
    %8 = vector.broadcast %2 : vector<32x1xf32> to vector<32x128xf32>
    %9 = arith.addf %8, %7 : vector<32x128xf32>
    %10 = vector.extract_strided_slice %1 {offsets = [0, 1], sizes = [32, 1], strides = [1, 1]} : vector<32x4xf32> to vector<32x1xf32>
    %11 = vector.extract_strided_slice %0 {offsets = [1, 0], sizes = [1, 128], strides = [1, 1]} : vector<4x128xf32> to vector<1x128xf32>
    %12 = vector.broadcast %10 : vector<32x1xf32> to vector<32x128xf32>
    %13 = vector.broadcast %11 : vector<1x128xf32> to vector<32x128xf32>
    %14 = arith.mulf %12, %13 : vector<32x128xf32>
    %15 = arith.addf %9, %14 : vector<32x128xf32>
    %16 = vector.extract_strided_slice %1 {offsets = [0, 2], sizes = [32, 1], strides = [1, 1]} : vector<32x4xf32> to vector<32x1xf32>
    %17 = vector.extract_strided_slice %0 {offsets = [2, 0], sizes = [1, 128], strides = [1, 1]} : vector<4x128xf32> to vector<1x128xf32>
    %18 = vector.broadcast %16 : vector<32x1xf32> to vector<32x128xf32>
    %19 = vector.broadcast %17 : vector<1x128xf32> to vector<32x128xf32>
    %20 = arith.mulf %18, %19 : vector<32x128xf32>
    %21 = arith.addf %15, %20 : vector<32x128xf32>
    %22 = vector.extract_strided_slice %1 {offsets = [0, 3], sizes = [32, 1], strides = [1, 1]} : vector<32x4xf32> to vector<32x1xf32>
    %23 = vector.extract_strided_slice %0 {offsets = [3, 0], sizes = [1, 128], strides = [1, 1]} : vector<4x128xf32> to vector<1x128xf32>
    %24 = vector.broadcast %22 : vector<32x1xf32> to vector<32x128xf32>
    %25 = vector.broadcast %23 : vector<1x128xf32> to vector<32x128xf32>
    %26 = arith.mulf %24, %25 : vector<32x128xf32>
    %27 = arith.addf %21, %26 : vector<32x128xf32>
    %c0_5 = arith.constant 0 : index
    %c0_6 = arith.constant 0 : index
    %28 = vector.load %arg4[%c0_5, %c0_6] : memref<32x128xf32, #tpu.memory_space<vmem>>, vector<32x128xf32>
    tpu.vector_store %arg4[%c0_5, %c0_6], %27 {strides = array<i32>} : memref<32x128xf32, #tpu.memory_space<vmem>>, vector<32x128xf32>,
    return
  }
  func.func @transform_0(%arg0: i32) -> (i32, i32) {
    %c0_i32 = arith.constant 0 : i32
    %c0_i32_0 = arith.constant 0 : i32
    return %c0_i32, %arg0 : i32, i32
  }
  func.func @transform_1(%arg0: i32) -> (i32, i32) {
    %c0_i32 = arith.constant 0 : i32
    %c0_i32_0 = arith.constant 0 : i32
    %c0_i32_1 = arith.constant 0 : i32
    return %c0_i32, %c0_i32_0 : i32, i32
  }
  func.func @transform_2(%arg0: i32) -> (i32, i32) {
    %c0_i32 = arith.constant 0 : i32
    %c0_i32_0 = arith.constant 0 : i32
    %c0_i32_1 = arith.constant 0 : i32
    return %c0_i32, %c0_i32_0 : i32, i32
  }
  func.func @transform_3(%arg0: i32) -> (i32, i32) {
    %c0_i32 = arith.constant 0 : i32
    %c0_i32_0 = arith.constant 0 : i32
    return %c0_i32, %arg0 : i32, i32
  }
}

</mosaic_0001>

<llo_original>
// kernel: tpu_custom_call.1
$region0: #{tpu_custom_call.1}
  #allocation0 [shape = 'u32[]', space=smem, size = 0x4, offset = 0x4, fixed_abs, tag = 'smem constant byte address 0x4 - core index']
  #allocation1 [shape = 'u32[144,128]{1,0:T(1,128)}', space=vmem, size = 0x12000, scoped, tag = 'internal scratch']
  %s0 = inlined_call_operand.vmem [shape: f32[4,128], index: 0, kind: input, shape index: {}]
  %s1 = inlined_call_operand.vmem [shape: f32[32,4], index: 1, kind: input, shape index: {}]
  %s2 = inlined_call_operand.vmem [shape: f32[32,1], index: 2, kind: input, shape index: {}]
  %s3 = inlined_call_operand.hbm [shape: f32[32,128], index: 3, kind: output, shape index: {}]
  %s4 = sld [smem:[#allocation0]]
  $region22: #{tpu_custom_call.1} parent=0
    _
  %s6 = ssub.s32 1, %s4
  %s7 = scalar_select 0, %s6, %s4
  $region1: #{tpu_custom_call.1} parent=0
    #allocation2 [shape = 'u8[16384]{0}', space=vmem, size = 0x4000, scoped, tag = 'output window, operand 0, single buffered']
    #allocation3 [shape = 's32[1]{0}', space=sflag, size = 0x4, scoped, tag = 'scoped memory for tpu_custom_call.1']
    %8 = vsyncpa [#allocation3], 0
    // Predicated region
    $region2: #{tpu_custom_call.1} parent=1 // pred_check
      _
    $region3: #{tpu_custom_call.1} parent=1 // pred_check_branch
      %10 = sbr.rel (0) target = $region5
    $region4: #{tpu_custom_call.1} parent=1 // pred_region
      _
    $region5: #{tpu_custom_call.1} parent=1 // pred_fallthru
      _
    // Predicated region
    $region6: #{tpu_custom_call.1} parent=1 // pred_check
      _
    $region7: #{tpu_custom_call.1} parent=1 // pred_check_branch
      %12 = sbr.rel (0) target = $region9
    $region8: #{tpu_custom_call.1} parent=1 // pred_region
      _
    $region9: #{tpu_custom_call.1} parent=1 // pred_fallthru
      _
    // Predicated region
    $region10: #{tpu_custom_call.1} parent=1 // pred_check
      _
    $region11: #{tpu_custom_call.1} parent=1 // pred_check_branch
      %14 = sbr.rel (0) target = $region13
    $region12: #{tpu_custom_call.1} parent=1 // pred_region
      _
    $region13: #{tpu_custom_call.1} parent=1 // pred_fallthru
      _
    %v15 = vld [vmem:[%s0] sm:$0xf]
    %v16 = vld [vmem:[%s1] sm:$0xff]
    %v17 = vld [vmem:[%s1 + $0x8] sm:$0xff]
    %v18 = vld [vmem:[%s1 + $0x10] sm:$0xff]
    %v19 = vld [vmem:[%s1 + $0x18] sm:$0xff]
    %v20 = vld [vmem:[%s2] sm:$0xff]
    %v21 = vld [vmem:[%s2 + $0x8] sm:$0xff]
    %v22 = vld [vmem:[%s2 + $0x10] sm:$0xff]
    %v23 = vld [vmem:[%s2 + $0x18] sm:$0xff]
    %25 = vset.pattern.permute.xlu0 0
    %26 = vperm.xlu0 %25, %v16
    %v27 = vpop.permute.xlu0 %26
    %30 = vset.pattern.permute.xlu0 0
    %31 = vperm.xlu0 %30, %v17
    %v32 = vpop.permute.xlu0 %31
    %35 = vset.pattern.permute.xlu0 0
    %36 = vperm.xlu0 %35, %v18
    %v37 = vpop.permute.xlu0 %36
    %40 = vset.pattern.permute.xlu0 0
    %41 = vperm.xlu0 %40, %v19
    %v42 = vpop.permute.xlu0 %41
    %v44 = vlaneseq
    %v45 = vshrl.u32 %v44, 7
    %v46 = vsub.s32 0, %v45
    %v47 = vrot.slane %v15, %v46
    %v48 = vmul.f32 %v27, %v47
    %v49 = vmul.f32 %v32, %v47
    %v50 = vmul.f32 %v37, %v47
    %v51 = vmul.f32 %v42, %v47
    %53 = vset.pattern.permute.xlu0 0
    %54 = vperm.xlu0 %53, %v20
    %v55 = vpop.permute.xlu0 %54
    %58 = vset.pattern.permute.xlu0 0
    %59 = vperm.xlu0 %58, %v21
    %v60 = vpop.permute.xlu0 %59
    %63 = vset.pattern.permute.xlu0 0
    %64 = vperm.xlu0 %63, %v22
    %v65 = vpop.permute.xlu0 %64
    %68 = vset.pattern.permute.xlu0 0
    %69 = vperm.xlu0 %68, %v23
    %v70 = vpop.permute.xlu0 %69
    %v72 = vadd.f32 %v55, %v48
    %v73 = vadd.f32 %v60, %v49
    %v74 = vadd.f32 %v65, %v50
    %v75 = vadd.f32 %v70, %v51
    %76 = vset.pattern.permute.xlu0 1
    %77 = vperm.xlu0 %76, %v16
    %v78 = vpop.permute.xlu0 %77
    %80 = vset.pattern.permute.xlu0 1
    %81 = vperm.xlu0 %80, %v17
    %v82 = vpop.permute.xlu0 %81
    %84 = vset.pattern.permute.xlu0 1
    %85 = vperm.xlu0 %84, %v18
    %v86 = vpop.permute.xlu0 %85
    %88 = vset.pattern.permute.xlu0 1
    %89 = vperm.xlu0 %88, %v19
    %v90 = vpop.permute.xlu0 %89
    %v92 = vlaneseq
    %v93 = vshrl.u32 %v92, 7
    %v94 = vsub.s32 1, %v93
    %v95 = vrot.slane %v15, %v94
    %v96 = vmul.f32 %v78, %v95
    %v97 = vmul.f32 %v82, %v95
    %v98 = vmul.f32 %v86, %v95
    %v99 = vmul.f32 %v90, %v95
    %v100 = vadd.f32 %v72, %v96
    %v101 = vadd.f32 %v73, %v97
    %v102 = vadd.f32 %v74, %v98
    %v103 = vadd.f32 %v75, %v99
    %104 = vset.pattern.permute.xlu0 2
    %105 = vperm.xlu0 %104, %v16
    %v106 = vpop.permute.xlu0 %105
    %108 = vset.pattern.permute.xlu0 2
    %109 = vperm.xlu0 %108, %v17
    %v110 = vpop.permute.xlu0 %109
    %112 = vset.pattern.permute.xlu0 2
    %113 = vperm.xlu0 %112, %v18
    %v114 = vpop.permute.xlu0 %113
    %116 = vset.pattern.permute.xlu0 2
    %117 = vperm.xlu0 %116, %v19
    %v118 = vpop.permute.xlu0 %117
    %v120 = vlaneseq
    %v121 = vshrl.u32 %v120, 7
    %v122 = vsub.s32 2, %v121
    %v123 = vrot.slane %v15, %v122
    %v124 = vmul.f32 %v106, %v123
    %v125 = vmul.f32 %v110, %v123
    %v126 = vmul.f32 %v114, %v123
    %v127 = vmul.f32 %v118, %v123
    %v128 = vadd.f32 %v100, %v124
    %v129 = vadd.f32 %v101, %v125
    %v130 = vadd.f32 %v102, %v126
    %v131 = vadd.f32 %v103, %v127
    %132 = vset.pattern.permute.xlu0 3
    %133 = vperm.xlu0 %132, %v16
    %v134 = vpop.permute.xlu0 %133
    %136 = vset.pattern.permute.xlu0 3
    %137 = vperm.xlu0 %136, %v17
    %v138 = vpop.permute.xlu0 %137
    %140 = vset.pattern.permute.xlu0 3
    %141 = vperm.xlu0 %140, %v18
    %v142 = vpop.permute.xlu0 %141
    %144 = vset.pattern.permute.xlu0 3
    %145 = vperm.xlu0 %144, %v19
    %v146 = vpop.permute.xlu0 %145
    %v148 = vlaneseq
    %v149 = vshrl.u32 %v148, 7
    %v150 = vsub.s32 3, %v149
    %v151 = vrot.slane %v15, %v150
    %v152 = vmul.f32 %v134, %v151
    %v153 = vmul.f32 %v138, %v151
    %v154 = vmul.f32 %v142, %v151
    %v155 = vmul.f32 %v146, %v151
    %v156 = vadd.f32 %v128, %v152
    %v157 = vadd.f32 %v129, %v153
    %v158 = vadd.f32 %v130, %v154
    %v159 = vadd.f32 %v131, %v155
    %160 = vst [vmem:[#allocation2] sm:$0xff] %v156
    %161 = vst [vmem:[#allocation2 + $0x8] sm:$0xff] %v157
    %162 = vst [vmem:[#allocation2 + $0x10] sm:$0xff] %v158
    %163 = vst [vmem:[#allocation2 + $0x18] sm:$0xff] %v159
    // Predicated region
    $region14: #{tpu_custom_call.1} parent=1 // pred_check
      _
    $region15: #{tpu_custom_call.1} parent=1 // pred_check_branch
      %165 = sbr.rel (0) target = $region17
    $region16: #{tpu_custom_call.1} parent=1 // pred_region
      %s167 = ssub.s32 512, 512
      %168 = vsyncadd [#allocation3], %s167
      %s169 = sshll.u32 [#allocation2], 4
      %s170 = int_to_ptr.vmem [resolvable:$true] %s169
      %175 = dma.vmem_to_hbm [thread:$0]  %s170, 512, %s3, [#allocation3], 128, 128, 8
    $region17: #{tpu_custom_call.1} parent=1 // pred_fallthru
      _
    // Predicated region
    $region18: #{tpu_custom_call.1} parent=1 // pred_check
      _
    $region19: #{tpu_custom_call.1} parent=1 // pred_check_branch
      %177 = sbr.rel (0) target = $region21
    $region20: #{tpu_custom_call.1} parent=1 // pred_region
      %178 = dma.done [#allocation3], 512
    $region21: #{tpu_custom_call.1} parent=1 // pred_fallthru
      _
    %179 = vsyncpa [#allocation3], 1

</llo_original>
